<compile_context>
chip_gen: v6e
topology: v6e:2x2x1
jax: 0.10.0
libtpu: 0.0.40
codegen_flags: <defaults>
</compile_context>

<pallas_src>
import functools

import jax
import jax.numpy as jnp
from jax.experimental import pallas as pl
from jax.experimental.pallas import tpu as pltpu

_LANES = 128
# Native sublane multiple per element size (f32 -> 8, bf16 -> 16, int8/fp8 -> 32).
_SUBLANES = {8: 8, 4: 8, 2: 16, 1: 32}


def _tpu_vmem_bytes() -> int:
    try:
        return int(pltpu.get_tpu_info().vmem_capacity_bytes)
    except Exception:
        return 64 << 20  # conservative: v7x per-core physical VMEM


# Scoped-VMEM budget: 3/4 of physical (≈48 MiB on v7x, ≈96 MiB on v5e/v6e).
_VMEM_LIMIT_BYTES = min((_tpu_vmem_bytes() * 3) // 4, 96 << 20)
# Per-block DMA budget for the tiled path: double-buffered input + output
# (4 blocks resident) plus headroom stays inside the scoped limit.
_BLOCK_BYTES = max(1 << 20, _VMEM_LIMIT_BYTES // 6)   # ~8 MiB v7x / ~16 MiB v5e,v6e

_DEFAULT_FAST_PATH_BYTES = 1 << 20        # below this: no copy at all
_DEFAULT_MAX_FULL_BLOCK_BYTES = 4 << 20   # above this: tiled / pipelined path


# --------------------------------------------------------------------------- #
# Kernels
# --------------------------------------------------------------------------- #
def _identity_kernel(*refs):
    # First half are input refs, second half the matching output refs.
    n = len(refs) // 2
    for i in range(n):
        refs[n + i][...] = refs[i][...]


def _tiled_copy_kernel(x_ref, o_ref):
    o_ref[...] = x_ref[...]


# --------------------------------------------------------------------------- #
# Wrappers
# --------------------------------------------------------------------------- #
@functools.partial(jax.jit, static_argnames=("vmem_limit_bytes",))
def _batched_full_copy(arrays, *, vmem_limit_bytes):
    """One pallas_call copying every array as its own full-array block."""
    arrays = tuple(arrays)
    total_bytes = sum(int(a.size) * a.dtype.itemsize for a in arrays)
    outs = pl.pallas_call(
        _identity_kernel,
        out_shape=tuple(jax.ShapeDtypeStruct(a.shape, a.dtype) for a in arrays),
        compiler_params=pltpu.CompilerParams(vmem_limit_bytes=vmem_limit_bytes),
        cost_estimate=pl.CostEstimate(
            flops=0, transcendentals=0, bytes_accessed=2 * total_bytes),
    )(*arrays)
    if not isinstance(outs, (tuple, list)):
        outs = (outs,)
    return tuple(outs)


@functools.partial(jax.jit, static_argnames=("block_bytes", "vmem_limit_bytes"))
def _tiled_copy(x, *, block_bytes, vmem_limit_bytes):
    """Tiled, pipelined, lane-dense identity copy of one large parameter."""
    orig_shape = x.shape
    flat = x.reshape(-1)
    n = int(flat.size)
    itemsize = jnp.dtype(flat.dtype).itemsize
    sub = _SUBLANES.get(itemsize, 8)

    # Lane-dense slab: pad only to a multiple of 128 elements (never to a
    # multiple of the block height, which could nearly double the traffic).
    rows = -(-n // _LANES)
    padded_n = rows * _LANES
    padded = padded_n != n
    if padded:
        flat = jnp.pad(flat, (0, padded_n - n))
    slab = flat.reshape(rows, _LANES)

    # Dtype-aware block height from a constant byte budget, rounded to the
    # dtype's native sublane multiple.
    block_rows = max(sub, (block_bytes // (_LANES * itemsize)) // sub * sub)
    block_rows = min(block_rows, -(-rows // sub) * sub)
    # Ensure >= 2 blocks so the "parallel" axis lands work on both TensorCores.
    half = (rows // 2) // sub * sub
    if half >= sub:
        block_rows = min(block_rows, half)

    grid = (pl.cdiv(rows, block_rows),)
    copied = pl.pallas_call(
        _tiled_copy_kernel,
        out_shape=jax.ShapeDtypeStruct((rows, _LANES), slab.dtype),
        grid=grid,
        in_specs=[pl.BlockSpec((block_rows, _LANES), lambda i: (i, 0))],
        out_specs=pl.BlockSpec((block_rows, _LANES), lambda i: (i, 0)),
        # Donate the slab only when it is a fresh padded intermediate; aliasing
        # a live caller buffer would force XLA to insert a defensive copy.
        input_output_aliases={0: 0} if padded else {},
        compiler_params=pltpu.CompilerParams(
            dimension_semantics=("parallel",),
            vmem_limit_bytes=vmem_limit_bytes),
        cost_estimate=pl.CostEstimate(
            flops=0, transcendentals=0, bytes_accessed=2 * padded_n * itemsize),
    )(slab)

    out_flat = copied.reshape(-1)
    if padded:
        out_flat = out_flat[:n]
    return out_flat.reshape(orig_shape)


class ParamDictContainer:
    """JAX/Pallas port of the TorchScript ParamDictContainer module."""

    def __init__(self, param_dict,
                 fast_path_bytes=_DEFAULT_FAST_PATH_BYTES,
                 max_full_block_bytes=_DEFAULT_MAX_FULL_BLOCK_BYTES,
                 block_bytes=_BLOCK_BYTES,
                 vmem_limit_bytes=_VMEM_LIMIT_BYTES):
        self.param_dict = dict(param_dict)
        self.fast_path_bytes = int(fast_path_bytes)
        self.max_full_block_bytes = int(max_full_block_bytes)
        self.block_bytes = int(block_bytes)
        self.vmem_limit_bytes = int(vmem_limit_bytes)

    def forward(self):
        """Returns the wrapped parameter dictionary (identity semantics)."""
        out = {}
        batched_names, batched_arrays, batched_bytes = [], [], []
        for name, p in self.param_dict.items():
            arr = jnp.asarray(p)
            nbytes = int(arr.size) * arr.dtype.itemsize
            if arr.size == 0 or arr.ndim == 0 or nbytes < self.fast_path_bytes:
                # Fast path: returning the input IS the forward semantics.
                out[name] = p
            elif nbytes <= self.max_full_block_bytes:
                batched_names.append(name)
                batched_arrays.append(arr)
                batched_bytes.append(nbytes)
            else:
                out[name] = _tiled_copy(
                    arr, block_bytes=self.block_bytes,
                    vmem_limit_bytes=self.vmem_limit_bytes)

        # Batched full-block copies, chunked so (inputs + outputs) of each
        # launch stay comfortably inside the scoped VMEM budget.
        if batched_arrays:
            group_budget = max(self.max_full_block_bytes,
                               self.vmem_limit_bytes // 3)
            start = 0
            while start < len(batched_arrays):
                end, acc = start, 0
                while end < len(batched_arrays) and (
                        end == start or acc + batched_bytes[end] <= group_budget):
                    acc += batched_bytes[end]
                    end += 1
                copies = _batched_full_copy(
                    tuple(batched_arrays[start:end]),
                    vmem_limit_bytes=self.vmem_limit_bytes)
                for name, c in zip(batched_names[start:end], copies):
                    out[name] = c
                start = end

        # Preserve original insertion order.
        return {name: out[name] for name in self.param_dict}

    __call__ = forward


# --------------------------------------------------------------------------- #
# Demo / self-check
# --------------------------------------------------------------------------- #
def _check(out, ref):
    assert list(out.keys()) == list(ref.keys())
    for name, r in ref.items():
        r = jnp.asarray(r)
        got = out[name]
        assert got.shape == r.shape, (name, got.shape, r.shape)
        assert got.dtype == r.dtype, (name, got.dtype, r.dtype)
        assert bool(jnp.array_equal(got, r)), name


if __name__ == "__main__":
    key = jax.random.PRNGKey(0)
    k1, k2, k3, k4, k5, k6 = jax.random.split(key, 6)
    param_dict = {
        "kp": jax.random.uniform(k1, (7,), dtype=jnp.float32),
        "kd": jax.random.uniform(k2, (7,), dtype=jnp.float32),
        "joint_pos_desired": jax.random.normal(k3, (7,), dtype=jnp.float32),
        "kx": jax.random.normal(k4, (6, 6), dtype=jnp.float32),
        "ee_wrench_bias": jax.random.normal(k5, (6,), dtype=jnp.bfloat16),
        "traj_buffer": jax.random.normal(k6, (256, 128), dtype=jnp.float32),
    }

    # Default config: everything here is tiny -> pure identity fast path.
    container = ParamDictContainer(param_dict)
    out = container()
    jax.block_until_ready(out)
    _check(out, param_dict)

    # Stress config: force every parameter through the Pallas paths
    # (batched full-block copy for the small ones, tiled lane-dense pipelined
    # copy for traj_buffer) to exercise both kernels end to end.
    stress = ParamDictContainer(param_dict, fast_path_bytes=0,
                                max_full_block_bytes=64 * 1024)
    out_stress = stress()
    jax.block_until_ready(out_stress)
    _check(out_stress, param_dict)

    print("KERNEL_OK")
</pallas_src>

<mosaic_0001>
module attributes {stable_mosaic.version = 11 : i64} {
  func.func @_tiled_copy_kernel(%arg0: i32, %arg1: memref<128x128xf32, #tpu.memory_space<vmem>>, %arg2: memref<128x128xf32, #tpu.memory_space<vmem>>) attributes {dimension_semantics = [#tpu.dimension_semantics<parallel>], iteration_bounds = array<i64: 2>, scalar_prefetch = 0 : i64, scratch_operands = 0 : i64, tpu.core_type = #tpu.core_type<tc>, window_params = [{transform_indices = @transform_0, window_bounds = array<i64: 128, 128>}, {transform_indices = @transform_1, window_bounds = array<i64: 128, 128>}]} {
    %c0 = arith.constant 0 : index
    %c0_0 = arith.constant 0 : index
    %0 = vector.load %arg1[%c0, %c0_0] : memref<128x128xf32, #tpu.memory_space<vmem>>, vector<128x128xf32>
    %c0_1 = arith.constant 0 : index
    %c0_2 = arith.constant 0 : index
    %1 = vector.load %arg2[%c0_1, %c0_2] : memref<128x128xf32, #tpu.memory_space<vmem>>, vector<128x128xf32>
    tpu.vector_store %arg2[%c0_1, %c0_2], %0 {strides = array<i32>} : memref<128x128xf32, #tpu.memory_space<vmem>>, vector<128x128xf32>,
    return
  }
  func.func @transform_0(%arg0: i32) -> (i32, i32) {
    %c0_i32 = arith.constant 0 : i32
    %c0_i32_0 = arith.constant 0 : i32
    return %arg0, %c0_i32 : i32, i32
  }
  func.func @transform_1(%arg0: i32) -> (i32, i32) {
    %c0_i32 = arith.constant 0 : i32
    %c0_i32_0 = arith.constant 0 : i32
    return %arg0, %c0_i32 : i32, i32
  }
}

</mosaic_0001>

<llo_original>
// kernel: _tiled_copy.1
$region0: #{_tiled_copy.1}
  #allocation0 [shape = 'u32[]', space=smem, size = 0x4, offset = 0x4, fixed_abs, tag = 'smem constant byte address 0x4 - core index']
  #allocation1 [shape = 'u32[144,128]{1,0:T(1,128)}', space=vmem, size = 0x12000, scoped, tag = 'internal scratch']
  %s0 = inlined_call_operand.hbm [shape: f32[256,128], index: 0, kind: input, shape index: {}]
  %s1 = inlined_call_operand.hbm [shape: f32[256,128], index: 1, kind: output, shape index: {}]
  %s2 = sld [smem:[#allocation0]]
  $region41: #{_tiled_copy.1} parent=0
    _
  %s4 = ssub.s32 1, %s2
  %s5 = scalar_select 0, %s4, %s2
  $region1: #{_tiled_copy.1} parent=0
    #allocation2 [shape = 'u8[131072]{0}', space=vmem, size = 0x20000, scoped, tag = 'input window, operand 0']
    #allocation3 [shape = 's32[2]{0}', space=sflag, size = 0x8, scoped, tag = 'scoped memory for _tiled_copy.1']
    #allocation4 [shape = 's32[2]{0}', space=sflag, size = 0x8, scoped, tag = 'scoped memory for _tiled_copy.1']
    #allocation5 [shape = 'u8[131072]{0}', space=vmem, size = 0x20000, scoped, tag = 'output window, operand 0']
    %6 = vsyncpa [#allocation3], 0
    %s7 = scalar_lea.sflag [#allocation3], 1
    %8 = vsyncpa %s7, 0
    %9 = vsyncpa [#allocation4], 0
    %s10 = scalar_lea.sflag [#allocation4], 1
    %11 = vsyncpa %s10, 0
    loop: start=0, step=1, limit=4
    $region2: #{_tiled_copy.1} parent=1 // loop_pre_header
      _
    $region3: #{_tiled_copy.1} parent=1 // loop_header
      %s13 = sphi 0, %s17
      %p14 = scmp.ge.s32.totalorder %s13, 4
      %s23 = sphi 0, %s25
      %s26 = sphi 0, %s23
      %s27 = sphi 0, %s26
      %s43 = sphi 0, %s27
      %s49 = sphi 0, %s51
      %s52 = sphi 0, %s49
      %s53 = sphi 0, %s52
      %s69 = sphi 0, %s53
    $region4: #{_tiled_copy.1} parent=1 // loop_header_branch
      %16 = sbr.rel (%p14) target = $region8
    $region5: #{_tiled_copy.1} parent=1 // loop_body
      %s18 = ssub.s32 %s13, 1
      %s19 = ssub.s32 %s13, 2
      %s20 = sadd.s32 %s13, 1
      %s21 = ssub.s32 %s13, %s20
      %p22 = scmp.eq.s32.totalorder %s21, 0
      %s24 = sadd.s32 %s23, 1
      %s25 = scalar_select %p22, %s23, %s24
      %p28 = pneg %p22
      %p29 = scmp.eq.s32.totalorder %s13, 1
      %p30 = por %p28, %p29
      %p31 = scmp.ne.s32.totalorder %s23, %s26
      %p32 = scmp.eq.s32.totalorder %s13, 0
      %p33 = por %p31, %p32
      %p34 = scmp.ne.s32.totalorder %s23, %s26
      %p35 = scmp.eq.s32.totalorder %s18, 1
      %p36 = por %p34, %p35
      %p37 = scmp.ne.s32.totalorder %s26, %s27
      %p38 = scmp.eq.s32.totalorder %s18, 0
      %p39 = por %p37, %p38
      %p40 = scmp.ne.s32.totalorder %s26, %s27
      %p41 = scmp.eq.s32.totalorder %s19, 1
      %p42 = por %p40, %p41
      %p44 = scmp.ne.s32.totalorder %s27, %s43
      %p45 = scmp.eq.s32.totalorder %s19, 0
      %p46 = por %p44, %p45
      %s47 = ssub.s32 %s13, %s20
      %p48 = scmp.eq.s32.totalorder %s47, 0
      %s50 = sadd.s32 %s49, 1
      %s51 = scalar_select %p48, %s49, %s50
      %p54 = pneg %p48
      %p55 = scmp.eq.s32.totalorder %s13, 1
      %p56 = por %p54, %p55
      %p57 = scmp.ne.s32.totalorder %s49, %s52
      %p58 = scmp.eq.s32.totalorder %s13, 0
      %p59 = por %p57, %p58
      %p60 = scmp.ne.s32.totalorder %s49, %s52
      %p61 = scmp.eq.s32.totalorder %s18, 1
      %p62 = por %p60, %p61
      %p63 = scmp.ne.s32.totalorder %s52, %s53
      %p64 = scmp.eq.s32.totalorder %s18, 0
      %p65 = por %p63, %p64
      %p66 = scmp.ne.s32.totalorder %s52, %s53
      %p67 = scmp.eq.s32.totalorder %s19, 1
      %p68 = por %p66, %p67
      %p70 = scmp.ne.s32.totalorder %s53, %s69
      %p71 = scmp.eq.s32.totalorder %s19, 0
      %p72 = por %p70, %p71
      %p73 = scmp.le.s32.totalorder 1, %s13
      %p74 = scmp.lt.s32.totalorder %s13, 3
      %p75 = pnand %p73, %p74
      %p76 = pneg %p75
      // Predicated region
      $region9: #{_tiled_copy.1} parent=5 // pred_check
        _
      $region10: #{_tiled_copy.1} parent=5 // pred_check_branch
        %78 = sbr.rel (%p75) target = $region12
      $region11: #{_tiled_copy.1} parent=5 // pred_region
        %s79 = ssub.s32 %s13, 1
      $region12: #{_tiled_copy.1} parent=5 // pred_fallthru
        _
      %p80 = scmp.lt.s32.totalorder %s13, 2
      // Predicated region
      $region13: #{_tiled_copy.1} parent=5 // pred_check
        %p81 = pneg %p80
      $region14: #{_tiled_copy.1} parent=5 // pred_check_branch
        %83 = sbr.rel (%p81) target = $region16
      $region15: #{_tiled_copy.1} parent=5 // pred_region
        // Predicated region
        $region17: #{_tiled_copy.1} parent=15 // pred_check
          %p84 = pneg %p33
        $region18: #{_tiled_copy.1} parent=15 // pred_check_branch
          %86 = sbr.rel (%p84) target = $region20
        $region19: #{_tiled_copy.1} parent=15 // pred_region
          %s87 = sand.u32 %s23, 1
          %s88 = scalar_lea.sflag [#allocation3], %s87
          %s89 = sand.u32 %s23, 1
          %s90 = smul.addr %s89, 128
          %s91 = scalar_lea.vmem [#allocation2], %s90
          %s92 = smul.u32 16, %s13
          %s94 = ssub.s32 2048, 2048
          %95 = vsyncadd %s88, %s94
          %s96 = smul.addr %s92, 128
          %s97 = scalar_lea.hbm %s0, %s96
          %s98 = sshll.u32 %s91, 4
          %s99 = int_to_ptr.vmem [resolvable:$true] %s98
          %104 = dma.hbm_to_vmem [thread:$0]  %s97, 2048, %s99, %s88, 128, 128, 8
        $region20: #{_tiled_copy.1} parent=15 // pred_fallthru
          _
      $region16: #{_tiled_copy.1} parent=5 // pred_fallthru
        _
      %p105 = scmp.le.s32.totalorder 1, %s13
      %p106 = scmp.lt.s32.totalorder %s13, 3
      %p107 = pnand %p105, %p106
      %p108 = pneg %p107
      // Predicated region
      $region21: #{_tiled_copy.1} parent=5 // pred_check
        _
      $region22: #{_tiled_copy.1} parent=5 // pred_check_branch
        %110 = sbr.rel (%p107) target = $region24
      $region23: #{_tiled_copy.1} parent=5 // pred_region
        %s111 = ssub.s32 %s13, 1
        %s112 = sand.u32 %s26, 1
        %s113 = scalar_lea.sflag [#allocation3], %s112
        %s114 = sand.u32 %s26, 1
        %s115 = smul.addr %s114, 128
        %s116 = scalar_lea.vmem [#allocation2], %s115
        // Predicated region
        $region25: #{_tiled_copy.1} parent=23 // pred_check
          %p117 = pneg %p39
        $region26: #{_tiled_copy.1} parent=23 // pred_check_branch
          %119 = sbr.rel (%p117) target = $region28
        $region27: #{_tiled_copy.1} parent=23 // pred_region
          %120 = dma.done %s113, 2048
        $region28: #{_tiled_copy.1} parent=23 // pred_fallthru
          _
        %s121 = sand.u32 %s26, 1
        %s122 = scalar_lea.sflag [#allocation3], %s121
        %s123 = sand.u32 %s26, 1
        %s124 = smul.addr %s123, 128
        %s125 = scalar_lea.vmem [#allocation2], %s124
        %p126 = pneg %p39
        %p127 = pneg %p36
        %p128 = pneg %p65
        %p129 = pneg %p62
        %s130 = sand.u32 %s52, 1
        %s131 = scalar_lea.sflag [#allocation4], %s130
        %s132 = sand.u32 %s52, 1
        %s133 = smul.addr %s132, 128
        %s134 = scalar_lea.vmem [#allocation5], %s133
        %s135 = smul.u32 16, %s18
        %s136 = smul.u32 16, %s18
        %v137 = vld [vmem:[%s116] sm:$0xff]
        %v138 = vld [vmem:[%s116 + $0x8] sm:$0xff]
        %v139 = vld [vmem:[%s116 + $0x10] sm:$0xff]
        %v140 = vld [vmem:[%s116 + $0x18] sm:$0xff]
        %v141 = vld [vmem:[%s116 + $0x20] sm:$0xff]
        %v142 = vld [vmem:[%s116 + $0x28] sm:$0xff]
        %v143 = vld [vmem:[%s116 + $0x30] sm:$0xff]
        %v144 = vld [vmem:[%s116 + $0x38] sm:$0xff]
        %v145 = vld [vmem:[%s116 + $0x40] sm:$0xff]
        %v146 = vld [vmem:[%s116 + $0x48] sm:$0xff]
        %v147 = vld [vmem:[%s116 + $0x50] sm:$0xff]
        %v148 = vld [vmem:[%s116 + $0x58] sm:$0xff]
        %v149 = vld [vmem:[%s116 + $0x60] sm:$0xff]
        %v150 = vld [vmem:[%s116 + $0x68] sm:$0xff]
        %v151 = vld [vmem:[%s116 + $0x70] sm:$0xff]
        %v152 = vld [vmem:[%s116 + $0x78] sm:$0xff]
        %153 = vst [vmem:[%s134] sm:$0xff] %v137
        %154 = vst [vmem:[%s134 + $0x8] sm:$0xff] %v138
        %155 = vst [vmem:[%s134 + $0x10] sm:$0xff] %v139
        %156 = vst [vmem:[%s134 + $0x18] sm:$0xff] %v140
        %157 = vst [vmem:[%s134 + $0x20] sm:$0xff] %v141
        %158 = vst [vmem:[%s134 + $0x28] sm:$0xff] %v142
        %159 = vst [vmem:[%s134 + $0x30] sm:$0xff] %v143
        %160 = vst [vmem:[%s134 + $0x38] sm:$0xff] %v144
        %161 = vst [vmem:[%s134 + $0x40] sm:$0xff] %v145
        %162 = vst [vmem:[%s134 + $0x48] sm:$0xff] %v146
        %163 = vst [vmem:[%s134 + $0x50] sm:$0xff] %v147
        %164 = vst [vmem:[%s134 + $0x58] sm:$0xff] %v148
        %165 = vst [vmem:[%s134 + $0x60] sm:$0xff] %v149
        %166 = vst [vmem:[%s134 + $0x68] sm:$0xff] %v150
        %167 = vst [vmem:[%s134 + $0x70] sm:$0xff] %v151
        %168 = vst [vmem:[%s134 + $0x78] sm:$0xff] %v152
        %s169 = sand.u32 %s52, 1
        %s170 = scalar_lea.sflag [#allocation4], %s169
        %s171 = sand.u32 %s52, 1
        %s172 = smul.addr %s171, 128
        %s173 = scalar_lea.vmem [#allocation5], %s172
        // Predicated region
        $region29: #{_tiled_copy.1} parent=23 // pred_check
          %p174 = pneg %p62
        $region30: #{_tiled_copy.1} parent=23 // pred_check_branch
          %176 = sbr.rel (%p174) target = $region32
        $region31: #{_tiled_copy.1} parent=23 // pred_region
          %s177 = smul.u32 16, %s18
          %s179 = ssub.s32 2048, 2048
          %180 = vsyncadd %s170, %s179
          %s181 = smul.addr %s177, 128
          %s182 = scalar_lea.hbm %s1, %s181
          %s183 = sshll.u32 %s173, 4
          %s184 = int_to_ptr.vmem [resolvable:$true] %s183
          %189 = dma.vmem_to_hbm [thread:$0]  %s184, 2048, %s182, %s170, 128, 128, 8
        $region32: #{_tiled_copy.1} parent=23 // pred_fallthru
          _
      $region24: #{_tiled_copy.1} parent=5 // pred_fallthru
        _
      %p190 = scmp.le.s32.totalorder 2, %s13
      // Predicated region
      $region33: #{_tiled_copy.1} parent=5 // pred_check
        %p191 = pneg %p190
      $region34: #{_tiled_copy.1} parent=5 // pred_check_branch
        %193 = sbr.rel (%p191) target = $region36
      $region35: #{_tiled_copy.1} parent=5 // pred_region
        %s194 = ssub.s32 %s13, 2
        // Predicated region
        $region37: #{_tiled_copy.1} parent=35 // pred_check
          %p195 = pneg %p68
        $region38: #{_tiled_copy.1} parent=35 // pred_check_branch
          %197 = sbr.rel (%p195) target = $region40
        $region39: #{_tiled_copy.1} parent=35 // pred_region
          %s198 = sand.u32 %s53, 1
          %s199 = scalar_lea.sflag [#allocation4], %s198
          %s200 = sand.u32 %s53, 1
          %s201 = smul.addr %s200, 128
          %s202 = scalar_lea.vmem [#allocation5], %s201
          %203 = dma.done %s199, 2048
        $region40: #{_tiled_copy.1} parent=35 // pred_fallthru
          _
      $region36: #{_tiled_copy.1} parent=5 // pred_fallthru
        _
    $region6: #{_tiled_copy.1} parent=1 // loop_footer
      %s17 = sadd.s32 1, %s13
    $region7: #{_tiled_copy.1} parent=1 // loop_footer_branch
      %12 = sbr.rel target = $region3
    $region8: #{_tiled_copy.1} parent=1 // loop_exit
      _
    %204 = vsyncpa [#allocation3], 1
    %s205 = scalar_lea.sflag [#allocation3], 1
    %206 = vsyncpa %s205, 1
    %207 = vsyncpa [#allocation4], 1
    %s208 = scalar_lea.sflag [#allocation4], 1
    %209 = vsyncpa %s208, 1

</llo_original>
